<compile_context>
chip_gen: v6e
topology: v6e:2x2x1
jax: 0.10.0
libtpu: 0.0.40
codegen_flags: <defaults>
</compile_context>

<pallas_src>
import jax
import jax.numpy as jnp
import numpy as np
from jax.experimental import pallas as pl
from jax.experimental.pallas import tpu as pltpu


def _make_kernel(C, Cout, th, L_in, L_out, use_vpu_mix):
    def kernel(x_ref, p_ref, w_ref, o_ref):
        # x_ref: (1, C, th, L_in)   lane axis holds r packed [even|odd] row pairs
        # p_ref: (L_in, L_out)      block-diagonal 2x2-average matrix (0.25 entries)
        # w_ref: SMEM (Cout*C,) f32 (VPU path)  OR  VMEM (Cout, C) (MXU path)
        # o_ref: (1, Cout, th, L_out) NCHW-packed output block (lane-dense)
        v = x_ref[0]                              # (C, th, L_in)
        flat = v.reshape(C * th, L_in)            # free collapse of sublane-major dims
        # One MXU matmul performs the full 2x2 average: large M = C*th, f32 acc.
        pooled = jnp.dot(flat, p_ref[...],
                         preferred_element_type=jnp.float32)   # (C*th, L_out) f32

        if use_vpu_mix:
            # Tiny channel mix on the VPU: C broadcast FMAs per output channel.
            # Weight scalars come from SMEM (flattened row-major (Cout, C)).
            for o in range(Cout):
                acc = w_ref[o * C + 0] * pooled[0 * th:1 * th]
                for c in range(1, C):
                    acc = acc + w_ref[o * C + c] * pooled[c * th:(c + 1) * th]
                o_ref[0, o] = acc.astype(o_ref.dtype)
        else:
            # MXU channel mix: keep operands in the input dtype, f32 accumulate.
            pooled3 = pooled.reshape(C, th, L_out).astype(x_ref.dtype)
            out = jnp.einsum("oc,ctv->otv", w_ref[...], pooled3,
                             preferred_element_type=jnp.float32)
            o_ref[0] = out.astype(o_ref.dtype)

    return kernel


def _pick_pack(Ho, Wo):
    """Row-pairs packed per lane group so output rows are lane-dense (>=128 lanes)."""
    if Wo >= 128:
        return 1
    target = -(-128 // Wo)                      # ceil(128 / Wo)
    cap = max(4 * target, 8)
    divisors = [d for d in range(1, min(Ho, cap) + 1) if Ho % d == 0]
    exact = [d for d in divisors if d >= target and (d * Wo) % 128 == 0]
    if exact:
        return min(exact)                       # unmasked vector stores
    geq = [d for d in divisors if d >= target]
    if geq:
        return min(geq)
    return max(divisors)


def _pick_block_rows(Hp, C, Cout, L_in, L_out, itemsize, budget_bytes, sub, n_batch):
    """Largest tile height (multiple of the dtype sublane tile) fitting the budget.

    Counts double-buffered input + output blocks plus f32 compute intermediates.
    """
    if Hp <= sub:
        return Hp                               # full-extent block is always legal
    per_row = ((2 * C * L_in + 2 * Cout * L_out) * itemsize
               + (C + Cout) * L_out * 4)        # pooled / out staging in f32
    th = max(sub, (budget_bytes // max(per_row, 1)) // sub * sub)
    th = min(th, (Hp // sub) * sub)
    # v7x megacore: keep >=2 parallel grid steps when the batch axis is 1.
    if n_batch == 1 and th >= Hp:
        th = max(sub, (((Hp + 1) // 2) // sub) * sub)
    return th


def downsample(x_nchw, weight_oc):
    """x_nchw: (N, C, H, W); weight_oc: (Cout, Cin) from the 1x1 conv (no bias)."""
    N, C, H, W = x_nchw.shape
    Cout = weight_oc.shape[0]
    assert H % 2 == 0 and W % 2 == 0, "0.5x bilinear == 2x2 avg pool needs even H, W"
    Ho, Wo = H // 2, W // 2
    dt = x_nchw.dtype
    itemsize = jnp.dtype(dt).itemsize
    sub = {4: 8, 2: 16, 1: 32}.get(itemsize, 8)   # dtype sublane tile

    # Lane packing: r consecutive row pairs side by side along the lane axis.
    r = _pick_pack(Ho, Wo)
    Hp = Ho // r
    L_in, L_out = r * 2 * W, r * Wo

    # Free (layout-preserving) NCHW reshape.
    x2 = x_nchw.reshape(N, C, Hp, L_in)

    # Block-diagonal pooling matrix: per row-pair group, 0.25 at source lanes
    # {2wo, 2wo+1, W+2wo, W+2wo+1} for output column wo (full 2x2 average).
    rows = jnp.arange(2 * W)
    cols = jnp.arange(Wo)
    p0 = (((rows % W)[:, None] // 2) == cols[None, :]).astype(jnp.float32) * 0.25
    p = jnp.kron(jnp.eye(r, dtype=jnp.float32), p0).astype(dt)

    # Per-generation VMEM budget (derated for v7x's 64 MiB part).
    try:
        vmem_cap = int(pltpu.get_tpu_info().vmem_capacity_bytes)
    except Exception:
        vmem_cap = 64 * 1024 * 1024
    vmem_limit = min((vmem_cap * 3) // 4, 64 * 1024 * 1024)
    budget = vmem_limit // 2

    th = _pick_block_rows(Hp, C, Cout, L_in, L_out, itemsize, budget, sub, N)
    grid = (N, pl.cdiv(Hp, th))

    # Tiny channel counts -> VPU broadcast-FMA mix; otherwise MXU.
    use_vpu_mix = (C * Cout) <= 512
    if use_vpu_mix:
        weight_arg = weight_oc.reshape(-1).astype(jnp.float32)   # SMEM, flat row-major
        w_spec = pl.BlockSpec(memory_space=pltpu.MemorySpace.SMEM)
    else:
        weight_arg = weight_oc.astype(dt)                        # MXU operand dtype
        w_spec = pl.BlockSpec((Cout, C), lambda n, i: (0, 0))

    kernel = _make_kernel(C, Cout, th, L_in, L_out, use_vpu_mix)

    cost = pl.CostEstimate(
        flops=int(2 * N * C * Hp * L_in * L_out + 2 * N * Cout * C * Ho * Wo),
        transcendentals=0,
        bytes_accessed=int(
            N * C * H * W * itemsize
            + N * Cout * Ho * Wo * itemsize
            + (L_in * L_out + Cout * C) * itemsize),
    )

    out = pl.pallas_call(
        kernel,
        out_shape=jax.ShapeDtypeStruct((N, Cout, Hp, L_out), dt),
        grid_spec=pltpu.PrefetchScalarGridSpec(
            num_scalar_prefetch=0,
            grid=grid,
            in_specs=[
                pl.BlockSpec((1, C, th, L_in), lambda n, i: (n, 0, i, 0)),
                pl.BlockSpec((L_in, L_out), lambda n, i: (0, 0)),
                w_spec,
            ],
            out_specs=pl.BlockSpec((1, Cout, th, L_out), lambda n, i: (n, 0, i, 0)),
        ),
        compiler_params=pltpu.CompilerParams(
            dimension_semantics=("parallel", "parallel"),
            vmem_limit_bytes=int(vmem_limit),
        ),
        cost_estimate=cost,
    )(x2, p, weight_arg)

    # Free reshape back: packed lane groups are exactly the contiguous NCHW rows.
    return out.reshape(N, Cout, Ho, Wo)


def _reference(x_nchw, weight_oc):
    # pure-JAX reference: 2x2 avg pool then 1x1 conv (no bias)
    N, C, H, W = x_nchw.shape
    pooled = x_nchw.reshape(N, C, H // 2, 2, W // 2, 2).mean(axis=(3, 5))
    return jnp.einsum("nchw,oc->nohw", pooled, weight_oc)


def _check(key, N, in_channels, s_factor, H, W):
    kx, kw = jax.random.split(key)
    x = jax.random.normal(kx, (N, in_channels, H, W), dtype=jnp.float32)
    weight = jax.random.normal(
        kw, (in_channels + s_factor, in_channels), dtype=jnp.float32) * 0.1
    out = jax.block_until_ready(downsample(x, weight))
    ref = _reference(x, weight)
    assert out.shape == (N, in_channels + s_factor, H // 2, W // 2), out.shape
    np.testing.assert_allclose(np.asarray(out), np.asarray(ref), rtol=1e-5, atol=1e-5)


if __name__ == "__main__":
    key = jax.random.PRNGKey(0)
    k1, k2, k3 = jax.random.split(key, 3)

    # Module config from the spec: Conv2d(4, 4+4, 1, bias=False) -> VPU mix path.
    _check(k1, N=2, in_channels=4, s_factor=4, H=16, W=16)
    # Packing with multiple packed rows per batch (Hp > 1), VPU path.
    _check(k2, N=1, in_channels=4, s_factor=4, H=32, W=32)
    # Larger channel counts -> MXU channel-mix path.
    _check(k3, N=2, in_channels=32, s_factor=16, H=16, W=16)

    print("KERNEL_OK")
</pallas_src>

<mosaic_0001>
module attributes {stable_mosaic.version = 11 : i64} {
  func.func @kernel(%arg0: i32, %arg1: i32, %arg2: memref<1x4x1x256xf32, #tpu.memory_space<vmem>>, %arg3: memref<256x64xf32, #tpu.memory_space<vmem>>, %arg4: memref<32xf32, #tpu.memory_space<smem>>, %arg5: memref<1x8x1x64xf32, #tpu.memory_space<vmem>>) attributes {dimension_semantics = [#tpu.dimension_semantics<parallel>, #tpu.dimension_semantics<parallel>], iteration_bounds = array<i64: 2, 1>, scalar_prefetch = 0 : i64, scratch_operands = 0 : i64, tpu.core_type = #tpu.core_type<tc>, window_params = [{transform_indices = @transform_0, window_bounds = array<i64: 1, 4, 1, 256>}, {pipeline_mode = #tpu.pipeline_mode<synchronous>, transform_indices = @transform_1, window_bounds = array<i64: 256, 64>}, {transform_indices = @transform_2, window_bounds = array<i64: 32>}, {transform_indices = @transform_3, window_bounds = array<i64: 1, 8, 1, 64>}]} {
    %c0 = arith.constant 0 : index
    %c0_0 = arith.constant 0 : index
    %c0_1 = arith.constant 0 : index
    %c0_2 = arith.constant 0 : index
    %0 = vector.load %arg2[%c0, %c0_0, %c0_1, %c0_2] : memref<1x4x1x256xf32, #tpu.memory_space<vmem>>, vector<1x4x1x256xf32>
    %1 = vector.shape_cast %0 : vector<1x4x1x256xf32> to vector<4x1x256xf32>
    %2 = vector.shape_cast %1 : vector<4x1x256xf32> to vector<4x256xf32>
    %c0_3 = arith.constant 0 : index
    %c0_4 = arith.constant 0 : index
    %3 = vector.load %arg3[%c0_3, %c0_4] : memref<256x64xf32, #tpu.memory_space<vmem>>, vector<256x64xf32>
    %cst = arith.constant dense<0.000000e+00> : vector<4x64xf32>
    %4 = tpu.matmul %2, %3, %cst {dimension_numbers = #tpu.dot_dimension_numbers<[1], [0], [0], [1], [0, 0, 1, 1], [], []>} : vector<4x256xf32>, vector<256x64xf32>, vector<4x64xf32> -> vector<4x64xf32>
    %c0_5 = arith.constant 0 : index
    %5 = memref.load %arg4[%c0_5] : memref<32xf32, #tpu.memory_space<smem>>
    %6 = vector.extract_strided_slice %4 {offsets = [0, 0], sizes = [1, 64], strides = [1, 1]} : vector<4x64xf32> to vector<1x64xf32>
    %7 = vector.broadcast %5 : f32 to vector<1x64xf32>
    %8 = arith.mulf %7, %6 : vector<1x64xf32>
    %c1 = arith.constant 1 : index
    %9 = memref.load %arg4[%c1] : memref<32xf32, #tpu.memory_space<smem>>
    %10 = vector.extract_strided_slice %4 {offsets = [1, 0], sizes = [1, 64], strides = [1, 1]} : vector<4x64xf32> to vector<1x64xf32>
    %11 = vector.broadcast %9 : f32 to vector<1x64xf32>
    %12 = arith.mulf %11, %10 : vector<1x64xf32>
    %13 = arith.addf %8, %12 : vector<1x64xf32>
    %c2 = arith.constant 2 : index
    %14 = memref.load %arg4[%c2] : memref<32xf32, #tpu.memory_space<smem>>
    %15 = vector.extract_strided_slice %4 {offsets = [2, 0], sizes = [1, 64], strides = [1, 1]} : vector<4x64xf32> to vector<1x64xf32>
    %16 = vector.broadcast %14 : f32 to vector<1x64xf32>
    %17 = arith.mulf %16, %15 : vector<1x64xf32>
    %18 = arith.addf %13, %17 : vector<1x64xf32>
    %c3 = arith.constant 3 : index
    %19 = memref.load %arg4[%c3] : memref<32xf32, #tpu.memory_space<smem>>
    %20 = vector.extract_strided_slice %4 {offsets = [3, 0], sizes = [1, 64], strides = [1, 1]} : vector<4x64xf32> to vector<1x64xf32>
    %21 = vector.broadcast %19 : f32 to vector<1x64xf32>
    %22 = arith.mulf %21, %20 : vector<1x64xf32>
    %23 = arith.addf %18, %22 : vector<1x64xf32>
    %c0_6 = arith.constant 0 : index
    %c0_7 = arith.constant 0 : index
    %c0_8 = arith.constant 0 : index
    %c0_9 = arith.constant 0 : index
    %24 = vector.load %arg5[%c0_6, %c0_7, %c0_8, %c0_9] : memref<1x8x1x64xf32, #tpu.memory_space<vmem>>, vector<1x1x1x64xf32>
    %25 = vector.shape_cast %24 : vector<1x1x1x64xf32> to vector<1x64xf32>
    %26 = vector.shape_cast %23 : vector<1x64xf32> to vector<1x1x1x64xf32>
    tpu.vector_store %arg5[%c0_6, %c0_7, %c0_8, %c0_9], %26 {strides = array<i32>} : memref<1x8x1x64xf32, #tpu.memory_space<vmem>>, vector<1x1x1x64xf32>,
    %c4 = arith.constant 4 : index
    %27 = memref.load %arg4[%c4] : memref<32xf32, #tpu.memory_space<smem>>
    %28 = vector.extract_strided_slice %4 {offsets = [0, 0], sizes = [1, 64], strides = [1, 1]} : vector<4x64xf32> to vector<1x64xf32>
    %29 = vector.broadcast %27 : f32 to vector<1x64xf32>
    %30 = arith.mulf %29, %28 : vector<1x64xf32>
    %c5 = arith.constant 5 : index
    %31 = memref.load %arg4[%c5] : memref<32xf32, #tpu.memory_space<smem>>
    %32 = vector.extract_strided_slice %4 {offsets = [1, 0], sizes = [1, 64], strides = [1, 1]} : vector<4x64xf32> to vector<1x64xf32>
    %33 = vector.broadcast %31 : f32 to vector<1x64xf32>
    %34 = arith.mulf %33, %32 : vector<1x64xf32>
    %35 = arith.addf %30, %34 : vector<1x64xf32>
    %c6 = arith.constant 6 : index
    %36 = memref.load %arg4[%c6] : memref<32xf32, #tpu.memory_space<smem>>
    %37 = vector.extract_strided_slice %4 {offsets = [2, 0], sizes = [1, 64], strides = [1, 1]} : vector<4x64xf32> to vector<1x64xf32>
    %38 = vector.broadcast %36 : f32 to vector<1x64xf32>
    %39 = arith.mulf %38, %37 : vector<1x64xf32>
    %40 = arith.addf %35, %39 : vector<1x64xf32>
    %c7 = arith.constant 7 : index
    %41 = memref.load %arg4[%c7] : memref<32xf32, #tpu.memory_space<smem>>
    %42 = vector.extract_strided_slice %4 {offsets = [3, 0], sizes = [1, 64], strides = [1, 1]} : vector<4x64xf32> to vector<1x64xf32>
    %43 = vector.broadcast %41 : f32 to vector<1x64xf32>
    %44 = arith.mulf %43, %42 : vector<1x64xf32>
    %45 = arith.addf %40, %44 : vector<1x64xf32>
    %c0_10 = arith.constant 0 : index
    %c1_11 = arith.constant 1 : index
    %c0_12 = arith.constant 0 : index
    %c0_13 = arith.constant 0 : index
    %46 = vector.load %arg5[%c0_10, %c1_11, %c0_12, %c0_13] : memref<1x8x1x64xf32, #tpu.memory_space<vmem>>, vector<1x1x1x64xf32>
    %47 = vector.shape_cast %46 : vector<1x1x1x64xf32> to vector<1x64xf32>
    %48 = vector.shape_cast %45 : vector<1x64xf32> to vector<1x1x1x64xf32>
    tpu.vector_store %arg5[%c0_10, %c1_11, %c0_12, %c0_13], %48 {strides = array<i32>} : memref<1x8x1x64xf32, #tpu.memory_space<vmem>>, vector<1x1x1x64xf32>,
    %c8 = arith.constant 8 : index
    %49 = memref.load %arg4[%c8] : memref<32xf32, #tpu.memory_space<smem>>
    %50 = vector.extract_strided_slice %4 {offsets = [0, 0], sizes = [1, 64], strides = [1, 1]} : vector<4x64xf32> to vector<1x64xf32>
    %51 = vector.broadcast %49 : f32 to vector<1x64xf32>
    %52 = arith.mulf %51, %50 : vector<1x64xf32>
    %c9 = arith.constant 9 : index
    %53 = memref.load %arg4[%c9] : memref<32xf32, #tpu.memory_space<smem>>
    %54 = vector.extract_strided_slice %4 {offsets = [1, 0], sizes = [1, 64], strides = [1, 1]} : vector<4x64xf32> to vector<1x64xf32>
    %55 = vector.broadcast %53 : f32 to vector<1x64xf32>
    %56 = arith.mulf %55, %54 : vector<1x64xf32>
    %57 = arith.addf %52, %56 : vector<1x64xf32>
    %c10 = arith.constant 10 : index
    %58 = memref.load %arg4[%c10] : memref<32xf32, #tpu.memory_space<smem>>
    %59 = vector.extract_strided_slice %4 {offsets = [2, 0], sizes = [1, 64], strides = [1, 1]} : vector<4x64xf32> to vector<1x64xf32>
    %60 = vector.broadcast %58 : f32 to vector<1x64xf32>
    %61 = arith.mulf %60, %59 : vector<1x64xf32>
    %62 = arith.addf %57, %61 : vector<1x64xf32>
    %c11 = arith.constant 11 : index
    %63 = memref.load %arg4[%c11] : memref<32xf32, #tpu.memory_space<smem>>
    %64 = vector.extract_strided_slice %4 {offsets = [3, 0], sizes = [1, 64], strides = [1, 1]} : vector<4x64xf32> to vector<1x64xf32>
    %65 = vector.broadcast %63 : f32 to vector<1x64xf32>
    %66 = arith.mulf %65, %64 : vector<1x64xf32>
    %67 = arith.addf %62, %66 : vector<1x64xf32>
    %c0_14 = arith.constant 0 : index
    %c2_15 = arith.constant 2 : index
    %c0_16 = arith.constant 0 : index
    %c0_17 = arith.constant 0 : index
    %68 = vector.load %arg5[%c0_14, %c2_15, %c0_16, %c0_17] : memref<1x8x1x64xf32, #tpu.memory_space<vmem>>, vector<1x1x1x64xf32>
    %69 = vector.shape_cast %68 : vector<1x1x1x64xf32> to vector<1x64xf32>
    %70 = vector.shape_cast %67 : vector<1x64xf32> to vector<1x1x1x64xf32>
    tpu.vector_store %arg5[%c0_14, %c2_15, %c0_16, %c0_17], %70 {strides = array<i32>} : memref<1x8x1x64xf32, #tpu.memory_space<vmem>>, vector<1x1x1x64xf32>,
    %c12 = arith.constant 12 : index
    %71 = memref.load %arg4[%c12] : memref<32xf32, #tpu.memory_space<smem>>
    %72 = vector.extract_strided_slice %4 {offsets = [0, 0], sizes = [1, 64], strides = [1, 1]} : vector<4x64xf32> to vector<1x64xf32>
    %73 = vector.broadcast %71 : f32 to vector<1x64xf32>
    %74 = arith.mulf %73, %72 : vector<1x64xf32>
    %c13 = arith.constant 13 : index
    %75 = memref.load %arg4[%c13] : memref<32xf32, #tpu.memory_space<smem>>
    %76 = vector.extract_strided_slice %4 {offsets = [1, 0], sizes = [1, 64], strides = [1, 1]} : vector<4x64xf32> to vector<1x64xf32>
    %77 = vector.broadcast %75 : f32 to vector<1x64xf32>
    %78 = arith.mulf %77, %76 : vector<1x64xf32>
    %79 = arith.addf %74, %78 : vector<1x64xf32>
    %c14 = arith.constant 14 : index
    %80 = memref.load %arg4[%c14] : memref<32xf32, #tpu.memory_space<smem>>
    %81 = vector.extract_strided_slice %4 {offsets = [2, 0], sizes = [1, 64], strides = [1, 1]} : vector<4x64xf32> to vector<1x64xf32>
    %82 = vector.broadcast %80 : f32 to vector<1x64xf32>
    %83 = arith.mulf %82, %81 : vector<1x64xf32>
    %84 = arith.addf %79, %83 : vector<1x64xf32>
    %c15 = arith.constant 15 : index
    %85 = memref.load %arg4[%c15] : memref<32xf32, #tpu.memory_space<smem>>
    %86 = vector.extract_strided_slice %4 {offsets = [3, 0], sizes = [1, 64], strides = [1, 1]} : vector<4x64xf32> to vector<1x64xf32>
    %87 = vector.broadcast %85 : f32 to vector<1x64xf32>
    %88 = arith.mulf %87, %86 : vector<1x64xf32>
    %89 = arith.addf %84, %88 : vector<1x64xf32>
    %c0_18 = arith.constant 0 : index
    %c3_19 = arith.constant 3 : index
    %c0_20 = arith.constant 0 : index
    %c0_21 = arith.constant 0 : index
    %90 = vector.load %arg5[%c0_18, %c3_19, %c0_20, %c0_21] : memref<1x8x1x64xf32, #tpu.memory_space<vmem>>, vector<1x1x1x64xf32>
    %91 = vector.shape_cast %90 : vector<1x1x1x64xf32> to vector<1x64xf32>
    %92 = vector.shape_cast %89 : vector<1x64xf32> to vector<1x1x1x64xf32>
    tpu.vector_store %arg5[%c0_18, %c3_19, %c0_20, %c0_21], %92 {strides = array<i32>} : memref<1x8x1x64xf32, #tpu.memory_space<vmem>>, vector<1x1x1x64xf32>,
    %c16 = arith.constant 16 : index
    %93 = memref.load %arg4[%c16] : memref<32xf32, #tpu.memory_space<smem>>
    %94 = vector.extract_strided_slice %4 {offsets = [0, 0], sizes = [1, 64], strides = [1, 1]} : vector<4x64xf32> to vector<1x64xf32>
    %95 = vector.broadcast %93 : f32 to vector<1x64xf32>
    %96 = arith.mulf %95, %94 : vector<1x64xf32>
    %c17 = arith.constant 17 : index
    %97 = memref.load %arg4[%c17] : memref<32xf32, #tpu.memory_space<smem>>
    %98 = vector.extract_strided_slice %4 {offsets = [1, 0], sizes = [1, 64], strides = [1, 1]} : vector<4x64xf32> to vector<1x64xf32>
    %99 = vector.broadcast %97 : f32 to vector<1x64xf32>
    %100 = arith.mulf %99, %98 : vector<1x64xf32>
    %101 = arith.addf %96, %100 : vector<1x64xf32>
    %c18 = arith.constant 18 : index
    %102 = memref.load %arg4[%c18] : memref<32xf32, #tpu.memory_space<smem>>
    %103 = vector.extract_strided_slice %4 {offsets = [2, 0], sizes = [1, 64], strides = [1, 1]} : vector<4x64xf32> to vector<1x64xf32>
    %104 = vector.broadcast %102 : f32 to vector<1x64xf32>
    %105 = arith.mulf %104, %103 : vector<1x64xf32>
    %106 = arith.addf %101, %105 : vector<1x64xf32>
    %c19 = arith.constant 19 : index
    %107 = memref.load %arg4[%c19] : memref<32xf32, #tpu.memory_space<smem>>
    %108 = vector.extract_strided_slice %4 {offsets = [3, 0], sizes = [1, 64], strides = [1, 1]} : vector<4x64xf32> to vector<1x64xf32>
    %109 = vector.broadcast %107 : f32 to vector<1x64xf32>
    %110 = arith.mulf %109, %108 : vector<1x64xf32>
    %111 = arith.addf %106, %110 : vector<1x64xf32>
    %c0_22 = arith.constant 0 : index
    %c4_23 = arith.constant 4 : index
    %c0_24 = arith.constant 0 : index
    %c0_25 = arith.constant 0 : index
    %112 = vector.load %arg5[%c0_22, %c4_23, %c0_24, %c0_25] : memref<1x8x1x64xf32, #tpu.memory_space<vmem>>, vector<1x1x1x64xf32>
    %113 = vector.shape_cast %112 : vector<1x1x1x64xf32> to vector<1x64xf32>
    %114 = vector.shape_cast %111 : vector<1x64xf32> to vector<1x1x1x64xf32>
    tpu.vector_store %arg5[%c0_22, %c4_23, %c0_24, %c0_25], %114 {strides = array<i32>} : memref<1x8x1x64xf32, #tpu.memory_space<vmem>>, vector<1x1x1x64xf32>,
    %c20 = arith.constant 20 : index
    %115 = memref.load %arg4[%c20] : memref<32xf32, #tpu.memory_space<smem>>
    %116 = vector.extract_strided_slice %4 {offsets = [0, 0], sizes = [1, 64], strides = [1, 1]} : vector<4x64xf32> to vector<1x64xf32>
    %117 = vector.broadcast %115 : f32 to vector<1x64xf32>
    %118 = arith.mulf %117, %116 : vector<1x64xf32>
    %c21 = arith.constant 21 : index
    %119 = memref.load %arg4[%c21] : memref<32xf32, #tpu.memory_space<smem>>
    %120 = vector.extract_strided_slice %4 {offsets = [1, 0], sizes = [1, 64], strides = [1, 1]} : vector<4x64xf32> to vector<1x64xf32>
    %121 = vector.broadcast %119 : f32 to vector<1x64xf32>
    %122 = arith.mulf %121, %120 : vector<1x64xf32>
    %123 = arith.addf %118, %122 : vector<1x64xf32>
    %c22 = arith.constant 22 : index
    %124 = memref.load %arg4[%c22] : memref<32xf32, #tpu.memory_space<smem>>
    %125 = vector.extract_strided_slice %4 {offsets = [2, 0], sizes = [1, 64], strides = [1, 1]} : vector<4x64xf32> to vector<1x64xf32>
    %126 = vector.broadcast %124 : f32 to vector<1x64xf32>
    %127 = arith.mulf %126, %125 : vector<1x64xf32>
    %128 = arith.addf %123, %127 : vector<1x64xf32>
    %c23 = arith.constant 23 : index
    %129 = memref.load %arg4[%c23] : memref<32xf32, #tpu.memory_space<smem>>
    %130 = vector.extract_strided_slice %4 {offsets = [3, 0], sizes = [1, 64], strides = [1, 1]} : vector<4x64xf32> to vector<1x64xf32>
    %131 = vector.broadcast %129 : f32 to vector<1x64xf32>
    %132 = arith.mulf %131, %130 : vector<1x64xf32>
    %133 = arith.addf %128, %132 : vector<1x64xf32>
    %c0_26 = arith.constant 0 : index
    %c5_27 = arith.constant 5 : index
    %c0_28 = arith.constant 0 : index
    %c0_29 = arith.constant 0 : index
    %134 = vector.load %arg5[%c0_26, %c5_27, %c0_28, %c0_29] : memref<1x8x1x64xf32, #tpu.memory_space<vmem>>, vector<1x1x1x64xf32>
    %135 = vector.shape_cast %134 : vector<1x1x1x64xf32> to vector<1x64xf32>
    %136 = vector.shape_cast %133 : vector<1x64xf32> to vector<1x1x1x64xf32>
    tpu.vector_store %arg5[%c0_26, %c5_27, %c0_28, %c0_29], %136 {strides = array<i32>} : memref<1x8x1x64xf32, #tpu.memory_space<vmem>>, vector<1x1x1x64xf32>,
    %c24 = arith.constant 24 : index
    %137 = memref.load %arg4[%c24] : memref<32xf32, #tpu.memory_space<smem>>
    %138 = vector.extract_strided_slice %4 {offsets = [0, 0], sizes = [1, 64], strides = [1, 1]} : vector<4x64xf32> to vector<1x64xf32>
    %139 = vector.broadcast %137 : f32 to vector<1x64xf32>
    %140 = arith.mulf %139, %138 : vector<1x64xf32>
    %c25 = arith.constant 25 : index
    %141 = memref.load %arg4[%c25] : memref<32xf32, #tpu.memory_space<smem>>
    %142 = vector.extract_strided_slice %4 {offsets = [1, 0], sizes = [1, 64], strides = [1, 1]} : vector<4x64xf32> to vector<1x64xf32>
    %143 = vector.broadcast %141 : f32 to vector<1x64xf32>
    %144 = arith.mulf %143, %142 : vector<1x64xf32>
    %145 = arith.addf %140, %144 : vector<1x64xf32>
    %c26 = arith.constant 26 : index
    %146 = memref.load %arg4[%c26] : memref<32xf32, #tpu.memory_space<smem>>
    %147 = vector.extract_strided_slice %4 {offsets = [2, 0], sizes = [1, 64], strides = [1, 1]} : vector<4x64xf32> to vector<1x64xf32>
    %148 = vector.broadcast %146 : f32 to vector<1x64xf32>
    %149 = arith.mulf %148, %147 : vector<1x64xf32>
    %150 = arith.addf %145, %149 : vector<1x64xf32>
    %c27 = arith.constant 27 : index
    %151 = memref.load %arg4[%c27] : memref<32xf32, #tpu.memory_space<smem>>
    %152 = vector.extract_strided_slice %4 {offsets = [3, 0], sizes = [1, 64], strides = [1, 1]} : vector<4x64xf32> to vector<1x64xf32>
    %153 = vector.broadcast %151 : f32 to vector<1x64xf32>
    %154 = arith.mulf %153, %152 : vector<1x64xf32>
    %155 = arith.addf %150, %154 : vector<1x64xf32>
    %c0_30 = arith.constant 0 : index
    %c6_31 = arith.constant 6 : index
    %c0_32 = arith.constant 0 : index
    %c0_33 = arith.constant 0 : index
    %156 = vector.load %arg5[%c0_30, %c6_31, %c0_32, %c0_33] : memref<1x8x1x64xf32, #tpu.memory_space<vmem>>, vector<1x1x1x64xf32>
    %157 = vector.shape_cast %156 : vector<1x1x1x64xf32> to vector<1x64xf32>
    %158 = vector.shape_cast %155 : vector<1x64xf32> to vector<1x1x1x64xf32>
    tpu.vector_store %arg5[%c0_30, %c6_31, %c0_32, %c0_33], %158 {strides = array<i32>} : memref<1x8x1x64xf32, #tpu.memory_space<vmem>>, vector<1x1x1x64xf32>,
    %c28 = arith.constant 28 : index
    %159 = memref.load %arg4[%c28] : memref<32xf32, #tpu.memory_space<smem>>
    %160 = vector.extract_strided_slice %4 {offsets = [0, 0], sizes = [1, 64], strides = [1, 1]} : vector<4x64xf32> to vector<1x64xf32>
    %161 = vector.broadcast %159 : f32 to vector<1x64xf32>
    %162 = arith.mulf %161, %160 : vector<1x64xf32>
    %c29 = arith.constant 29 : index
    %163 = memref.load %arg4[%c29] : memref<32xf32, #tpu.memory_space<smem>>
    %164 = vector.extract_strided_slice %4 {offsets = [1, 0], sizes = [1, 64], strides = [1, 1]} : vector<4x64xf32> to vector<1x64xf32>
    %165 = vector.broadcast %163 : f32 to vector<1x64xf32>
    %166 = arith.mulf %165, %164 : vector<1x64xf32>
    %167 = arith.addf %162, %166 : vector<1x64xf32>
    %c30 = arith.constant 30 : index
    %168 = memref.load %arg4[%c30] : memref<32xf32, #tpu.memory_space<smem>>
    %169 = vector.extract_strided_slice %4 {offsets = [2, 0], sizes = [1, 64], strides = [1, 1]} : vector<4x64xf32> to vector<1x64xf32>
    %170 = vector.broadcast %168 : f32 to vector<1x64xf32>
    %171 = arith.mulf %170, %169 : vector<1x64xf32>
    %172 = arith.addf %167, %171 : vector<1x64xf32>
    %c31 = arith.constant 31 : index
    %173 = memref.load %arg4[%c31] : memref<32xf32, #tpu.memory_space<smem>>
    %174 = vector.extract_strided_slice %4 {offsets = [3, 0], sizes = [1, 64], strides = [1, 1]} : vector<4x64xf32> to vector<1x64xf32>
    %175 = vector.broadcast %173 : f32 to vector<1x64xf32>
    %176 = arith.mulf %175, %174 : vector<1x64xf32>
    %177 = arith.addf %172, %176 : vector<1x64xf32>
    %c0_34 = arith.constant 0 : index
    %c7_35 = arith.constant 7 : index
    %c0_36 = arith.constant 0 : index
    %c0_37 = arith.constant 0 : index
    %178 = vector.load %arg5[%c0_34, %c7_35, %c0_36, %c0_37] : memref<1x8x1x64xf32, #tpu.memory_space<vmem>>, vector<1x1x1x64xf32>
    %179 = vector.shape_cast %178 : vector<1x1x1x64xf32> to vector<1x64xf32>
    %180 = vector.shape_cast %177 : vector<1x64xf32> to vector<1x1x1x64xf32>
    tpu.vector_store %arg5[%c0_34, %c7_35, %c0_36, %c0_37], %180 {strides = array<i32>} : memref<1x8x1x64xf32, #tpu.memory_space<vmem>>, vector<1x1x1x64xf32>,
    return
  }
  func.func @transform_0(%arg0: i32, %arg1: i32) -> (i32, i32, i32, i32) {
    %c0_i32 = arith.constant 0 : i32
    %c0_i32_0 = arith.constant 0 : i32
    %c0_i32_1 = arith.constant 0 : i32
    return %arg0, %c0_i32, %arg1, %c0_i32_0 : i32, i32, i32, i32
  }
  func.func @transform_1(%arg0: i32, %arg1: i32) -> (i32, i32) {
    %c0_i32 = arith.constant 0 : i32
    %c0_i32_0 = arith.constant 0 : i32
    %c0_i32_1 = arith.constant 0 : i32
    return %c0_i32, %c0_i32_0 : i32, i32
  }
  func.func @transform_2(%arg0: i32, %arg1: i32) -> i32 {
    %c0_i32 = arith.constant 0 : i32
    %c0_i32_0 = arith.constant 0 : i32
    return %c0_i32 : i32
  }
  func.func @transform_3(%arg0: i32, %arg1: i32) -> (i32, i32, i32, i32) {
    %c0_i32 = arith.constant 0 : i32
    %c0_i32_0 = arith.constant 0 : i32
    %c0_i32_1 = arith.constant 0 : i32
    return %arg0, %c0_i32, %arg1, %c0_i32_0 : i32, i32, i32, i32
  }
}

</mosaic_0001>

<llo_original>
// kernel: tpu_custom_call.1
$region0: #{tpu_custom_call.1}
  #allocation0 [shape = 'u32[]', space=smem, size = 0x4, offset = 0x4, fixed_abs, tag = 'smem constant byte address 0x4 - core index']
  #allocation1 [shape = 'u32[144,128]{1,0:T(1,128)}', space=vmem, size = 0x12000, scoped, tag = 'internal scratch']
  %s0 = inlined_call_operand.vmem [shape: f32[2,4,1,256], index: 0, kind: input, shape index: {}]
  %s1 = inlined_call_operand.vmem [shape: f32[256,64], index: 1, kind: input, shape index: {}]
  %s2 = inlined_call_operand.vmem [shape: f32[32], index: 2, kind: input, shape index: {}]
  %s3 = inlined_call_operand.hbm [shape: f32[2,8,1,64], index: 3, kind: output, shape index: {}]
  %s4 = sld [smem:[#allocation0]]
  $region49: #{tpu_custom_call.1} parent=0
    _
  %s6 = ssub.s32 1, %s4
  %s7 = scalar_select 0, %s6, %s4
  $region1: #{tpu_custom_call.1} parent=0
    #allocation2 [shape = 'u8[512]{0}', space=smem, size = 0x200, scoped, tag = 'input window, operand 2, single buffered']
    #allocation3 [shape = 's32[2]{0}', space=sflag, size = 0x8, scoped, tag = 'scoped memory for tpu_custom_call.1']
    #allocation4 [shape = 's32[2]{0}', space=sflag, size = 0x8, scoped, tag = 'scoped memory for tpu_custom_call.1']
    #allocation5 [shape = 'u8[8192]{0}', space=vmem, size = 0x2000, scoped, tag = 'output window, operand 0']
    %8 = vsyncpa [#allocation4], 0
    %9 = vsyncpa [#allocation3], 0
    %s10 = scalar_lea.sflag [#allocation3], 1
    %11 = vsyncpa %s10, 0
    loop: start=0, step=1, limit=4
    $region2: #{tpu_custom_call.1} parent=1 // loop_pre_header
      _
    $region3: #{tpu_custom_call.1} parent=1 // loop_header
      %s13 = sphi 0, %s17
      %p14 = scmp.ge.s32.totalorder %s13, 4
      %s20 = sphi 0, %s32
      %s21 = sphi 0, %s28
      %s22 = sphi 0, %s20
      %s23 = sphi 0, %s21
      %s24 = sphi 0, %s22
      %s25 = sphi 0, %s23
      %s37 = sphi 0, %s39
      %s40 = sphi 0, %s37
      %s41 = sphi 0, %s40
      %s57 = sphi 0, %s41
      %s61 = sphi 0, %s61
      %s63 = sphi 0, %s61
      %s64 = sphi 0, %s63
      %s78 = sphi 0, %s64
      %s82 = sphi 0, %s82
      %s84 = sphi 0, %s82
      %s85 = sphi 0, %s84
      %s99 = sphi 0, %s85
      %s107 = sphi 0, %s109
      %s110 = sphi 0, %s107
      %s111 = sphi 0, %s110
      %s127 = sphi 0, %s111
    $region4: #{tpu_custom_call.1} parent=1 // loop_header_branch
      %16 = sbr.rel (%p14) target = $region8
    $region5: #{tpu_custom_call.1} parent=1 // loop_body
      %s18 = ssub.s32 %s13, 1
      %s19 = ssub.s32 %s13, 2
      %s26 = sadd.s32 1, %s21
      %p27 = scmp.ge.s32.totalorder %s26, 1
      %s28 = scalar_select %p27, 0, %s26
      %s29 = sadd.s32 1, %s20
      %s30 = scalar_select %p27, %s29, %s20
      %p31 = scmp.ge.s32.totalorder %s30, 2
      %s32 = scalar_select %p31, 0, %s30
      %s33 = ssub.s32 %s20, %s32
      %s34 = ssub.s32 %s21, %s28
      %s35 = sor.u32 %s33, %s34
      %p36 = scmp.eq.s32.totalorder %s35, 0
      %s38 = sadd.s32 %s37, 1
      %s39 = scalar_select %p36, %s37, %s38
      %p42 = pneg %p36
      %p43 = scmp.eq.s32.totalorder %s13, 1
      %p44 = por %p42, %p43
      %p45 = scmp.ne.s32.totalorder %s37, %s40
      %p46 = scmp.eq.s32.totalorder %s13, 0
      %p47 = por %p45, %p46
      %p48 = scmp.ne.s32.totalorder %s37, %s40
      %p49 = scmp.eq.s32.totalorder %s18, 1
      %p50 = por %p48, %p49
      %p51 = scmp.ne.s32.totalorder %s40, %s41
      %p52 = scmp.eq.s32.totalorder %s18, 0
      %p53 = por %p51, %p52
      %p54 = scmp.ne.s32.totalorder %s40, %s41
      %p55 = scmp.eq.s32.totalorder %s19, 1
      %p56 = por %p54, %p55
      %p58 = scmp.ne.s32.totalorder %s41, %s57
      %p59 = scmp.eq.s32.totalorder %s19, 0
      %p60 = por %p58, %p59
      %s62 = sadd.s32 %s61, 1
      %p65 = scmp.eq.s32.totalorder %s13, 1
      %p66 = scmp.ne.s32.totalorder %s61, %s63
      %p67 = scmp.eq.s32.totalorder %s13, 0
      %p68 = por %p66, %p67
      %p69 = scmp.ne.s32.totalorder %s61, %s63
      %p70 = scmp.eq.s32.totalorder %s18, 1
      %p71 = por %p69, %p70
      %p72 = scmp.ne.s32.totalorder %s63, %s64
      %p73 = scmp.eq.s32.totalorder %s18, 0
      %p74 = por %p72, %p73
      %p75 = scmp.ne.s32.totalorder %s63, %s64
      %p76 = scmp.eq.s32.totalorder %s19, 1
      %p77 = por %p75, %p76
      %p79 = scmp.ne.s32.totalorder %s64, %s78
      %p80 = scmp.eq.s32.totalorder %s19, 0
      %p81 = por %p79, %p80
      %s83 = sadd.s32 %s82, 1
      %p86 = scmp.eq.s32.totalorder %s13, 1
      %p87 = scmp.ne.s32.totalorder %s82, %s84
      %p88 = scmp.eq.s32.totalorder %s13, 0
      %p89 = por %p87, %p88
      %p90 = scmp.ne.s32.totalorder %s82, %s84
      %p91 = scmp.eq.s32.totalorder %s18, 1
      %p92 = por %p90, %p91
      %p93 = scmp.ne.s32.totalorder %s84, %s85
      %p94 = scmp.eq.s32.totalorder %s18, 0
      %p95 = por %p93, %p94
      %p96 = scmp.ne.s32.totalorder %s84, %s85
      %p97 = scmp.eq.s32.totalorder %s19, 1
      %p98 = por %p96, %p97
      %p100 = scmp.ne.s32.totalorder %s85, %s99
      %p101 = scmp.eq.s32.totalorder %s19, 0
      %p102 = por %p100, %p101
      %s103 = ssub.s32 %s20, %s32
      %s104 = ssub.s32 %s21, %s28
      %s105 = sor.u32 %s103, %s104
      %p106 = scmp.eq.s32.totalorder %s105, 0
      %s108 = sadd.s32 %s107, 1
      %s109 = scalar_select %p106, %s107, %s108
      %p112 = pneg %p106
      %p113 = scmp.eq.s32.totalorder %s13, 1
      %p114 = por %p112, %p113
      %p115 = scmp.ne.s32.totalorder %s107, %s110
      %p116 = scmp.eq.s32.totalorder %s13, 0
      %p117 = por %p115, %p116
      %p118 = scmp.ne.s32.totalorder %s107, %s110
      %p119 = scmp.eq.s32.totalorder %s18, 1
      %p120 = por %p118, %p119
      %p121 = scmp.ne.s32.totalorder %s110, %s111
      %p122 = scmp.eq.s32.totalorder %s18, 0
      %p123 = por %p121, %p122
      %p124 = scmp.ne.s32.totalorder %s110, %s111
      %p125 = scmp.eq.s32.totalorder %s19, 1
      %p126 = por %p124, %p125
      %p128 = scmp.ne.s32.totalorder %s111, %s127
      %p129 = scmp.eq.s32.totalorder %s19, 0
      %p130 = por %p128, %p129
      %p131 = scmp.le.s32.totalorder 1, %s13
      %p132 = scmp.lt.s32.totalorder %s13, 3
      %p133 = pnand %p131, %p132
      %p134 = pneg %p133
      // Predicated region
      $region9: #{tpu_custom_call.1} parent=5 // pred_check
        _
      $region10: #{tpu_custom_call.1} parent=5 // pred_check_branch
        %136 = sbr.rel (%p133) target = $region12
      $region11: #{tpu_custom_call.1} parent=5 // pred_region
        %s137 = ssub.s32 %s13, 1
        // Predicated region
        $region13: #{tpu_custom_call.1} parent=11 // pred_check
          %p138 = pneg %p74
        $region14: #{tpu_custom_call.1} parent=11 // pred_check_branch
          %140 = sbr.rel (%p138) target = $region16
        $region15: #{tpu_custom_call.1} parent=11 // pred_region
          _
        $region16: #{tpu_custom_call.1} parent=11 // pred_fallthru
          _
        // Predicated region
        $region17: #{tpu_custom_call.1} parent=11 // pred_check
          %p141 = pneg %p95
        $region18: #{tpu_custom_call.1} parent=11 // pred_check_branch
          %143 = sbr.rel (%p141) target = $region20
        $region19: #{tpu_custom_call.1} parent=11 // pred_region
          %s145 = ssub.s32 16, 16
          %146 = vsyncadd [#allocation4], %s145
          %s148 = sshll.u32 %s2, 4
          %s149 = int_to_ptr.vmem [resolvable:$true] %s148
          %151 = dma.vmem_to_smem %s149, 16, [#allocation2], [#allocation4]
        $region20: #{tpu_custom_call.1} parent=11 // pred_fallthru
          _
      $region12: #{tpu_custom_call.1} parent=5 // pred_fallthru
        _
      %p152 = scmp.lt.s32.totalorder %s13, 2
      // Predicated region
      $region21: #{tpu_custom_call.1} parent=5 // pred_check
        %p153 = pneg %p152
      $region22: #{tpu_custom_call.1} parent=5 // pred_check_branch
        %155 = sbr.rel (%p153) target = $region24
      $region23: #{tpu_custom_call.1} parent=5 // pred_region
        // Predicated region
        $region25: #{tpu_custom_call.1} parent=23 // pred_check
          %p156 = pneg %p47
        $region26: #{tpu_custom_call.1} parent=23 // pred_check_branch
          %158 = sbr.rel (%p156) target = $region28
        $region27: #{tpu_custom_call.1} parent=23 // pred_region
          %p159 = scmp.lt.s32.totalorder %s20, 1
          %s160 = scalar_select %p159, %s20, 1
          %p161 = scmp.lt.s32.totalorder %s21, 0
          %s162 = scalar_select %p161, %s21, 0
          %s163 = smul.addr %s162, 2
          %s164 = smul.addr %s160, 8
          %s165 = sadd.s32 %s163, %s164
          %s166 = scalar_lea.vmem %s0, %s165
        $region28: #{tpu_custom_call.1} parent=23 // pred_fallthru
          _
      $region24: #{tpu_custom_call.1} parent=5 // pred_fallthru
        _
      %p167 = scmp.le.s32.totalorder 1, %s13
      %p168 = scmp.lt.s32.totalorder %s13, 3
      %p169 = pnand %p167, %p168
      %p170 = pneg %p169
      // Predicated region
      $region29: #{tpu_custom_call.1} parent=5 // pred_check
        _
      $region30: #{tpu_custom_call.1} parent=5 // pred_check_branch
        %172 = sbr.rel (%p169) target = $region32
      $region31: #{tpu_custom_call.1} parent=5 // pred_region
        %s173 = ssub.s32 %s13, 1
        // Predicated region
        $region33: #{tpu_custom_call.1} parent=31 // pred_check
          %p174 = pneg %p95
        $region34: #{tpu_custom_call.1} parent=31 // pred_check_branch
          %176 = sbr.rel (%p174) target = $region36
        $region35: #{tpu_custom_call.1} parent=31 // pred_region
          %177 = dma.done [#allocation4], 16
        $region36: #{tpu_custom_call.1} parent=31 // pred_fallthru
          _
        %178 = sfence
        %p179 = scmp.lt.s32.totalorder %s22, 1
        %s180 = scalar_select %p179, %s22, 1
        %p181 = scmp.lt.s32.totalorder %s23, 0
        %s182 = scalar_select %p181, %s23, 0
        %s183 = smul.addr %s182, 2
        %s184 = smul.addr %s180, 8
        %s185 = sadd.s32 %s183, %s184
        %s186 = scalar_lea.vmem %s0, %s185
        %p187 = pneg %p53
        %p188 = pneg %p50
        %p189 = pneg %p74
        %p190 = pneg %p71
        %p191 = pneg %p95
        %p192 = pneg %p92
        %p193 = pneg %p123
        %p194 = pneg %p120
        %s195 = sand.u32 %s110, 1
        %s196 = scalar_lea.sflag [#allocation3], %s195
        %s197 = sand.u32 %s110, 1
        %s198 = smul.addr %s197, 8
        %s199 = scalar_lea.vmem [#allocation5], %s198
        %p200 = scmp.lt.s32.totalorder %s22, 1
        %s201 = scalar_select %p200, %s22, 1
        %p202 = scmp.lt.s32.totalorder %s23, 0
        %s203 = scalar_select %p202, %s23, 0
        %s204 = smul.addr %s203, 2
        %s205 = smul.addr %s201, 8
        %s206 = sadd.s32 %s204, %s205
        %s207 = scalar_lea.vmem %s0, %s206
        %v208 = vld [vmem:[%s207] sm:$0x3]
        %v209 = vld [vmem:[%s207 + $0x2] sm:$0x3]
        %v210 = vld [vmem:[%s207 + $0x4] sm:$0x3]
        %v211 = vld [vmem:[%s207 + $0x6] sm:$0x3]
        %v212 = vld [vmem:[%s1] sm:$0xff]
        %v213 = vld [vmem:[%s1 + $0x8] sm:$0xff]
        %v214 = vld [vmem:[%s1 + $0x10] sm:$0xff]
        %v215 = vld [vmem:[%s1 + $0x18] sm:$0xff]
        %v216 = vld [vmem:[%s1 + $0x20] sm:$0xff]
        %v217 = vld [vmem:[%s1 + $0x28] sm:$0xff]
        %v218 = vld [vmem:[%s1 + $0x30] sm:$0xff]
        %v219 = vld [vmem:[%s1 + $0x38] sm:$0xff]
        %v220 = vld [vmem:[%s1 + $0x40] sm:$0xff]
        %v221 = vld [vmem:[%s1 + $0x48] sm:$0xff]
        %v222 = vld [vmem:[%s1 + $0x50] sm:$0xff]
        %v223 = vld [vmem:[%s1 + $0x58] sm:$0xff]
        %v224 = vld [vmem:[%s1 + $0x60] sm:$0xff]
        %v225 = vld [vmem:[%s1 + $0x68] sm:$0xff]
        %v226 = vld [vmem:[%s1 + $0x70] sm:$0xff]
        %v227 = vld [vmem:[%s1 + $0x78] sm:$0xff]
        %v228 = vld [vmem:[%s1 + $0x80] sm:$0xff]
        %v229 = vld [vmem:[%s1 + $0x88] sm:$0xff]
        %v230 = vld [vmem:[%s1 + $0x90] sm:$0xff]
        %v231 = vld [vmem:[%s1 + $0x98] sm:$0xff]
        %v232 = vld [vmem:[%s1 + $0xa0] sm:$0xff]
        %v233 = vld [vmem:[%s1 + $0xa8] sm:$0xff]
        %v234 = vld [vmem:[%s1 + $0xb0] sm:$0xff]
        %v235 = vld [vmem:[%s1 + $0xb8] sm:$0xff]
        %v236 = vld [vmem:[%s1 + $0xc0] sm:$0xff]
        %v237 = vld [vmem:[%s1 + $0xc8] sm:$0xff]
        %v238 = vld [vmem:[%s1 + $0xd0] sm:$0xff]
        %v239 = vld [vmem:[%s1 + $0xd8] sm:$0xff]
        %v240 = vld [vmem:[%s1 + $0xe0] sm:$0xff]
        %v241 = vld [vmem:[%s1 + $0xe8] sm:$0xff]
        %v242 = vld [vmem:[%s1 + $0xf0] sm:$0xff]
        %v243 = vld [vmem:[%s1 + $0xf8] sm:$0xff]
        %v248 = vcombine.low %v208, %v209
        %v249 = vcombine.low %v210, %v211
        %v251 = vunpack.c.l.s4 1966171168
        %v252 = vunpack.c.0.s8 %v251
        %v253 = vlaneseq
        %v254 = vshrl.u32 %v253, 7
        %v255 = vsub.s32 %v252, %v254
        %v256 = vrot.slane %v248, %v255
        %v258 = vunpack.c.l.s4 1966171168
        %v259 = vunpack.c.0.s8 %v258
        %v260 = vlaneseq
        %v261 = vshrl.u32 %v260, 7
        %v262 = vsub.s32 %v259, %v261
        %v263 = vrot.slane %v249, %v262
        %v264 = vcombine.low %v256, %v263
        %v265 = vcombine.high %v256, %v263
        %v267 = vunpack.c.l.s4 1966171168
        %v268 = vunpack.c.0.s8 %v267
        %v269 = vlaneseq
        %v270 = vshrl.u32 %v269, 7
        %v271 = vsub.s32 %v268, %v270
        %v272 = vrot.slane %v264, %v271
        %v274 = vunpack.c.l.s4 1966171168
        %v275 = vunpack.c.0.s8 %v274
        %v276 = vlaneseq
        %v277 = vshrl.u32 %v276, 7
        %v278 = vsub.s32 %v275, %v277
        %v279 = vrot.slane %v265, %v278
        %282 = vmatprep.subr.mxu0 0.0
        %283 = vmatpush1.msra.mxu0 %v227
        %284 = vmatprep.subr.mxu0 0.0
        %285 = vmatpush1.msra.mxu0 %v226
        %286 = vmatprep.subr.mxu0 0.0
        %287 = vmatpush1.msra.mxu0 %v225
        %288 = vmatprep.subr.mxu0 0.0
        %289 = vmatpush1.msra.mxu0 %v224
        %290 = vmatprep.subr.mxu0 0.0
        %291 = vmatpush1.msra.mxu0 %v223
        %292 = vmatprep.subr.mxu0 0.0
        %293 = vmatpush1.msra.mxu0 %v222
        %294 = vmatprep.subr.mxu0 0.0
        %295 = vmatpush1.msra.mxu0 %v221
        %296 = vmatprep.subr.mxu0 0.0
        %297 = vmatpush1.msra.mxu0 %v220
        %298 = vmatprep.subr.mxu0 0.0
        %299 = vmatpush1.msra.mxu0 %v219
        %300 = vmatprep.subr.mxu0 0.0
        %301 = vmatpush1.msra.mxu0 %v218
        %302 = vmatprep.subr.mxu0 0.0
        %303 = vmatpush1.msra.mxu0 %v217
        %304 = vmatprep.subr.mxu0 0.0
        %305 = vmatpush1.msra.mxu0 %v216
        %306 = vmatprep.subr.mxu0 0.0
        %307 = vmatpush1.msra.mxu0 %v215
        %308 = vmatprep.subr.mxu0 0.0
        %309 = vmatpush1.msra.mxu0 %v214
        %310 = vmatprep.subr.mxu0 0.0
        %311 = vmatpush1.msra.mxu0 %v213
        %312 = vmatprep.subr.mxu0 0.0
        %313 = vmatpush1.msra.mxu0 %v212
        %314 = vmatprep.subr.mxu0 0.0
        %315 = vmatpush2.msra.mxu0 %v243
        %316 = vmatprep.subr.mxu0 0.0
        %317 = vmatpush2.msra.mxu0 %v242
        %318 = vmatprep.subr.mxu0 0.0
        %319 = vmatpush2.msra.mxu0 %v241
        %320 = vmatprep.subr.mxu0 0.0
        %321 = vmatpush2.msra.mxu0 %v240
        %322 = vmatprep.subr.mxu0 0.0
        %323 = vmatpush2.msra.mxu0 %v239
        %324 = vmatprep.subr.mxu0 0.0
        %325 = vmatpush2.msra.mxu0 %v238
        %326 = vmatprep.subr.mxu0 0.0
        %327 = vmatpush2.msra.mxu0 %v237
        %328 = vmatprep.subr.mxu0 0.0
        %329 = vmatpush2.msra.mxu0 %v236
        %330 = vmatprep.subr.mxu0 0.0
        %331 = vmatpush2.msra.mxu0 %v235
        %332 = vmatprep.subr.mxu0 0.0
        %333 = vmatpush2.msra.mxu0 %v234
        %334 = vmatprep.subr.mxu0 0.0
        %335 = vmatpush2.msra.mxu0 %v233
        %336 = vmatprep.subr.mxu0 0.0
        %337 = vmatpush2.msra.mxu0 %v232
        %338 = vmatprep.subr.mxu0 0.0
        %339 = vmatpush2.msra.mxu0 %v231
        %340 = vmatprep.subr.mxu0 0.0
        %341 = vmatpush2.msra.mxu0 %v230
        %342 = vmatprep.subr.mxu0 0.0
        %343 = vmatpush2.msra.mxu0 %v229
        %344 = vmatprep.subr.mxu0 0.0
        %345 = vmatpush2.msra.mxu0 %v228
        %346 = vmatprep.mubr.f32.mxu0 %v279
        %347 = vmatmul.mubr.f32.gmra.mxu0 %v272
        %v348 = vpop.f32.mrf.mxu0
        %v349 = vadd.f32 0.0, %v348
        %v350 = vpop.f32.mrf.mxu0
        %351 = vdwg.mxu0
        %s352 = sld [smem:[#allocation2]]
        %v353 = vstv %s352
        %v354 = vmul.f32 %v353, %v349
        %s355 = sld [smem:[#allocation2 + $0x1]]
        %v356 = vstv %s355
        %v357 = vmul.f32 %v356, %v349
        %v359 = vrot.slane %v357, 1
        %v361 = vadd.f32 %v354, %v359
        %s362 = sld [smem:[#allocation2 + $0x2]]
        %v363 = vstv %s362
        %v364 = vmul.f32 %v363, %v349
        %v366 = vrot.slane %v364, 2
        %v368 = vadd.f32 %v361, %v366
        %s369 = sld [smem:[#allocation2 + $0x3]]
        %v370 = vstv %s369
        %v371 = vmul.f32 %v370, %v349
        %v373 = vrot.slane %v371, 3
        %v375 = vadd.f32 %v368, %v373
        %vm376 = vcmask 516096
        %377 = vst.msk [vmem:[%s199] sm:$0x1] %vm376, %v375
        %s378 = sld [smem:[#allocation2 + $0x4]]
        %v379 = vstv %s378
        %v380 = vmul.f32 %v379, %v349
        %s381 = sld [smem:[#allocation2 + $0x5]]
        %v382 = vstv %s381
        %v383 = vmul.f32 %v382, %v349
        %v385 = vrot.slane %v383, 1
        %v387 = vadd.f32 %v380, %v385
        %s388 = sld [smem:[#allocation2 + $0x6]]
        %v389 = vstv %s388
        %v390 = vmul.f32 %v389, %v349
        %v392 = vrot.slane %v390, 2
        %v394 = vadd.f32 %v387, %v392
        %s395 = sld [smem:[#allocation2 + $0x7]]
        %v396 = vstv %s395
        %v397 = vmul.f32 %v396, %v349
        %v399 = vrot.slane %v397, 3
        %v401 = vadd.f32 %v394, %v399
        %s402 = scalar_lea.vmem %s199, 1 [#allocation5]
        %403 = vst.msk [vmem:[%s402] sm:$0x1] %vm376, %v401
        %s404 = sld [smem:[#allocation2 + $0x8]]
        %v405 = vstv %s404
        %v406 = vmul.f32 %v405, %v349
        %s407 = sld [smem:[#allocation2 + $0x9]]
        %v408 = vstv %s407
        %v409 = vmul.f32 %v408, %v349
        %v411 = vrot.slane %v409, 1
        %v413 = vadd.f32 %v406, %v411
        %s414 = sld [smem:[#allocation2 + $0xa]]
        %v415 = vstv %s414
        %v416 = vmul.f32 %v415, %v349
        %v418 = vrot.slane %v416, 2
        %v420 = vadd.f32 %v413, %v418
        %s421 = sld [smem:[#allocation2 + $0xb]]
        %v422 = vstv %s421
        %v423 = vmul.f32 %v422, %v349
        %v425 = vrot.slane %v423, 3
        %v427 = vadd.f32 %v420, %v425
        %s428 = scalar_lea.vmem %s199, 2 [#allocation5]
        %429 = vst.msk [vmem:[%s428] sm:$0x1] %vm376, %v427
        %s430 = sld [smem:[#allocation2 + $0xc]]
        %v431 = vstv %s430
        %v432 = vmul.f32 %v431, %v349
        %s433 = sld [smem:[#allocation2 + $0xd]]
        %v434 = vstv %s433
        %v435 = vmul.f32 %v434, %v349
        %v437 = vrot.slane %v435, 1
        %v439 = vadd.f32 %v432, %v437
        %s440 = sld [smem:[#allocation2 + $0xe]]
        %v441 = vstv %s440
        %v442 = vmul.f32 %v441, %v349
        %v444 = vrot.slane %v442, 2
        %v446 = vadd.f32 %v439, %v444
        %s447 = sld [smem:[#allocation2 + $0xf]]
        %v448 = vstv %s447
        %v449 = vmul.f32 %v448, %v349
        %v451 = vrot.slane %v449, 3
        %v453 = vadd.f32 %v446, %v451
        %s454 = scalar_lea.vmem %s199, 3 [#allocation5]
        %455 = vst.msk [vmem:[%s454] sm:$0x1] %vm376, %v453
        %s456 = sld [smem:[#allocation2 + $0x10]]
        %v457 = vstv %s456
        %v458 = vmul.f32 %v457, %v349
        %s459 = sld [smem:[#allocation2 + $0x11]]
        %v460 = vstv %s459
        %v461 = vmul.f32 %v460, %v349
        %v463 = vrot.slane %v461, 1
        %v465 = vadd.f32 %v458, %v463
        %s466 = sld [smem:[#allocation2 + $0x12]]
        %v467 = vstv %s466
        %v468 = vmul.f32 %v467, %v349
        %v470 = vrot.slane %v468, 2
        %v472 = vadd.f32 %v465, %v470
        %s473 = sld [smem:[#allocation2 + $0x13]]
        %v474 = vstv %s473
        %v475 = vmul.f32 %v474, %v349
        %v477 = vrot.slane %v475, 3
        %v479 = vadd.f32 %v472, %v477
        %s480 = scalar_lea.vmem %s199, 4 [#allocation5]
        %481 = vst.msk [vmem:[%s480] sm:$0x1] %vm376, %v479
        %s482 = sld [smem:[#allocation2 + $0x14]]
        %v483 = vstv %s482
        %v484 = vmul.f32 %v483, %v349
        %s485 = sld [smem:[#allocation2 + $0x15]]
        %v486 = vstv %s485
        %v487 = vmul.f32 %v486, %v349
        %v489 = vrot.slane %v487, 1
        %v491 = vadd.f32 %v484, %v489
        %s492 = sld [smem:[#allocation2 + $0x16]]
        %v493 = vstv %s492
        %v494 = vmul.f32 %v493, %v349
        %v496 = vrot.slane %v494, 2
        %v498 = vadd.f32 %v491, %v496
        %s499 = sld [smem:[#allocation2 + $0x17]]
        %v500 = vstv %s499
        %v501 = vmul.f32 %v500, %v349
        %v503 = vrot.slane %v501, 3
        %v505 = vadd.f32 %v498, %v503
        %s506 = scalar_lea.vmem %s199, 5 [#allocation5]
        %507 = vst.msk [vmem:[%s506] sm:$0x1] %vm376, %v505
        %s508 = sld [smem:[#allocation2 + $0x18]]
        %v509 = vstv %s508
        %v510 = vmul.f32 %v509, %v349
        %s511 = sld [smem:[#allocation2 + $0x19]]
        %v512 = vstv %s511
        %v513 = vmul.f32 %v512, %v349
        %v515 = vrot.slane %v513, 1
        %v517 = vadd.f32 %v510, %v515
        %s518 = sld [smem:[#allocation2 + $0x1a]]
        %v519 = vstv %s518
        %v520 = vmul.f32 %v519, %v349
        %v522 = vrot.slane %v520, 2
        %v524 = vadd.f32 %v517, %v522
        %s525 = sld [smem:[#allocation2 + $0x1b]]
        %v526 = vstv %s525
        %v527 = vmul.f32 %v526, %v349
        %v529 = vrot.slane %v527, 3
        %v531 = vadd.f32 %v524, %v529
        %s532 = scalar_lea.vmem %s199, 6 [#allocation5]
        %533 = vst.msk [vmem:[%s532] sm:$0x1] %vm376, %v531
        %s534 = sld [smem:[#allocation2 + $0x1c]]
        %v535 = vstv %s534
        %v536 = vmul.f32 %v535, %v349
        %s537 = sld [smem:[#allocation2 + $0x1d]]
        %v538 = vstv %s537
        %v539 = vmul.f32 %v538, %v349
        %v541 = vrot.slane %v539, 1
        %v543 = vadd.f32 %v536, %v541
        %s544 = sld [smem:[#allocation2 + $0x1e]]
        %v545 = vstv %s544
        %v546 = vmul.f32 %v545, %v349
        %v548 = vrot.slane %v546, 2
        %v550 = vadd.f32 %v543, %v548
        %s551 = sld [smem:[#allocation2 + $0x1f]]
        %v552 = vstv %s551
        %v553 = vmul.f32 %v552, %v349
        %v555 = vrot.slane %v553, 3
        %v557 = vadd.f32 %v550, %v555
        %s558 = scalar_lea.vmem %s199, 7 [#allocation5]
        %559 = vst.msk [vmem:[%s558] sm:$0x1] %vm376, %v557
        %s560 = sand.u32 %s110, 1
        %s561 = scalar_lea.sflag [#allocation3], %s560
        %s562 = sand.u32 %s110, 1
        %s563 = smul.addr %s562, 8
        %s564 = scalar_lea.vmem [#allocation5], %s563
        // Predicated region
        $region37: #{tpu_custom_call.1} parent=31 // pred_check
          %p565 = pneg %p120
        $region38: #{tpu_custom_call.1} parent=31 // pred_check_branch
          %567 = sbr.rel (%p565) target = $region40
        $region39: #{tpu_custom_call.1} parent=31 // pred_region
          %s569 = ssub.s32 128, 128
          %570 = vsyncadd %s561, %s569
          %s571 = smul.addr %s22, 8
          %s572 = sadd.s32 %s23, %s571
          %s573 = smul.addr %s572, 16
          %s574 = scalar_lea.hbm %s3, %s573
          %s575 = sshll.u32 %s564, 4
          %s576 = int_to_ptr.vmem [resolvable:$true] %s575
          %581 = dma.vmem_to_hbm [thread:$0]  %s576, 128, %s574, %s561, 16, 16, 1
        $region40: #{tpu_custom_call.1} parent=31 // pred_fallthru
          _
      $region32: #{tpu_custom_call.1} parent=5 // pred_fallthru
        _
      %p582 = scmp.le.s32.totalorder 2, %s13
      // Predicated region
      $region41: #{tpu_custom_call.1} parent=5 // pred_check
        %p583 = pneg %p582
      $region42: #{tpu_custom_call.1} parent=5 // pred_check_branch
        %585 = sbr.rel (%p583) target = $region44
      $region43: #{tpu_custom_call.1} parent=5 // pred_region
        %s586 = ssub.s32 %s13, 2
        // Predicated region
        $region45: #{tpu_custom_call.1} parent=43 // pred_check
          %p587 = pneg %p126
        $region46: #{tpu_custom_call.1} parent=43 // pred_check_branch
          %589 = sbr.rel (%p587) target = $region48
        $region47: #{tpu_custom_call.1} parent=43 // pred_region
          %s590 = sand.u32 %s111, 1
          %s591 = scalar_lea.sflag [#allocation3], %s590
          %s592 = sand.u32 %s111, 1
          %s593 = smul.addr %s592, 8
          %s594 = scalar_lea.vmem [#allocation5], %s593
          %595 = dma.done %s591, 128
        $region48: #{tpu_custom_call.1} parent=43 // pred_fallthru
          _
      $region44: #{tpu_custom_call.1} parent=5 // pred_fallthru
        _
    $region6: #{tpu_custom_call.1} parent=1 // loop_footer
      %s17 = sadd.s32 1, %s13
    $region7: #{tpu_custom_call.1} parent=1 // loop_footer_branch
      %12 = sbr.rel target = $region3
    $region8: #{tpu_custom_call.1} parent=1 // loop_exit
      _
    %596 = vsyncpa [#allocation3], 1
    %s597 = scalar_lea.sflag [#allocation3], 1
    %598 = vsyncpa %s597, 1
    %599 = vsyncpa [#allocation4], 1
    %s600 = scalar_lea.sflag [#allocation4], 1
    %601 = vsyncpa %s600, 1

</llo_original>
